<compile_context>
chip_gen: v6e
topology: v6e:2x2x1
jax: 0.10.0
libtpu: 0.0.40
codegen_flags: <defaults>
</compile_context>

<pallas_src>
import functools

import jax
import jax.numpy as jnp
from jax import lax
from jax.experimental import pallas as pl
from jax.experimental.pallas import tpu as pltpu


# ----------------------------------------------------------------------------
# layout helpers: channels-first, zero-padded, flattened, zero-margined
# ----------------------------------------------------------------------------
def _geom(H, W):
    Hp, Wp = H + 2, W + 2
    pp = Hp * Wp                          # padded-image pixel count
    margin = W + 3                        # |max tap shift| = (W+2) + 1
    ptot = pp + 2 * margin
    taps = tuple(dy * Wp + dx for dy in (-1, 0, 1) for dx in (-1, 0, 1))
    return pp, margin, ptot, taps


def _to_wide(x, margin):
    """(B, C, H, W) -> (B, C, Ptot) bf16: zero pad ring + flatten + zero margins."""
    B, C, H, W = x.shape
    xp = jnp.pad(x.astype(jnp.bfloat16), ((0, 0), (0, 0), (1, 1), (1, 1)))
    xf = xp.reshape(B, C, (H + 2) * (W + 2))
    return jnp.pad(xf, ((0, 0), (0, 0), (margin, margin)))


def _to_flat(x):
    """(B, C, H, W) -> (B, C, (H+2)*(W+2)) bf16 (pad ring, no margins)."""
    B, C, H, W = x.shape
    xp = jnp.pad(x.astype(jnp.bfloat16), ((0, 0), (0, 0), (1, 1), (1, 1)))
    return xp.reshape(B, C, (H + 2) * (W + 2))


def _from_flat(y, H, W):
    """(B, C, (H+2)*(W+2)) -> (B, C, H, W): drop the pad ring."""
    B, C, _ = y.shape
    return y.reshape(B, C, H + 2, W + 2)[:, :, 1:-1, 1:-1]


def _w_taps(w):
    """(3,3,Cin,Cout) HWIO -> (9, Cout, Cin) bf16 per-tap matrices."""
    return jnp.transpose(w, (0, 1, 3, 2)).reshape(
        9, w.shape[3], w.shape[2]).astype(jnp.bfloat16)


def _b_col(b):
    """(1, Cout) -> (Cout, 1) f32."""
    return b.reshape(-1, 1).astype(jnp.float32)


def _full_spec(shape):
    """BlockSpec covering a whole (small) array, same block every grid step."""
    return pl.BlockSpec(shape, lambda i, n=len(shape): (0,) * n)


# ----------------------------------------------------------------------------
# Pallas kernel: single 3x3 conv (+ bias + ReLU + optional fused skip-add)
# ----------------------------------------------------------------------------
def _conv3x3_kernel(*refs, taps, pp, margin, relu, has_res):
    if has_res:
        x_ref, w_ref, b_ref, r_ref, o_ref = refs
    else:
        x_ref, w_ref, b_ref, o_ref = refs
        r_ref = None

    acc = None
    for t, s in enumerate(taps):
        lo = margin + s
        tap = x_ref[0, :, lo:lo + pp]                 # (Cin, pp) lane-offset slice
        part = jnp.dot(w_ref[t], tap, preferred_element_type=jnp.float32)
        acc = part if acc is None else acc + part
    acc = acc + b_ref[...]                            # (Cout, 1) broadcast
    if relu:
        acc = jnp.maximum(acc, 0.0)
    if r_ref is not None:                             # fused decoder skip-add
        acc = acc + r_ref[0].astype(jnp.float32)
    o_ref[0] = acc.astype(o_ref.dtype)


def conv3x3(x, w, b, *, relu=True, residual=None, out_dtype=jnp.bfloat16):
    """3x3 conv, padding 1, stride 1, NCHW, one fused Pallas call per layer.

    `residual` (added AFTER the ReLU) is fused in-kernel.  Output is lane-dense
    (pixels on the lane axis) and comes back as (B, Cout, H, W).
    """
    B, Cin, H, W = x.shape
    Cout = w.shape[-1]
    pp, margin, ptot, taps = _geom(H, W)

    xw = _to_wide(x, margin)
    wk = _w_taps(w)
    bk = _b_col(b)

    in_specs = [
        pl.BlockSpec((1, Cin, ptot), lambda i: (i, 0, 0)),
        _full_spec((9, Cout, Cin)),
        _full_spec((Cout, 1)),
    ]
    args = [xw, wk, bk]
    has_res = residual is not None
    if has_res:
        args.append(_to_flat(residual))
        in_specs.append(pl.BlockSpec((1, Cout, pp), lambda i: (i, 0, 0)))

    out_isz = jnp.dtype(out_dtype).itemsize
    bytes_accessed = (xw.size * 2 + wk.size * 2 + bk.size * 4
                      + B * Cout * pp * out_isz
                      + (B * Cout * pp * 2 if has_res else 0))
    cost = pl.CostEstimate(flops=int(2 * B * 9 * Cin * Cout * pp),
                           transcendentals=0,
                           bytes_accessed=int(bytes_accessed))

    out = pl.pallas_call(
        functools.partial(_conv3x3_kernel, taps=taps, pp=pp, margin=margin,
                          relu=relu, has_res=has_res),
        out_shape=jax.ShapeDtypeStruct((B, Cout, pp), out_dtype),
        grid=(B,),
        in_specs=in_specs,
        out_specs=pl.BlockSpec((1, Cout, pp), lambda i: (i, 0, 0)),
        compiler_params=pltpu.CompilerParams(dimension_semantics=("parallel",)),
        cost_estimate=cost,
    )(*args)
    return _from_flat(out, H, W)


# ----------------------------------------------------------------------------
# Pallas kernel: fused detail-reconstruction head (dr1..dr4, concat included)
# ----------------------------------------------------------------------------
def _dr_head_kernel(feat_ref, x_ref, mask_ref,
                    w1a_ref, w1b_ref, b1_ref, w2_ref, b2_ref,
                    w3_ref, b3_ref, w4_ref, b4_ref,
                    o_ref, act_ref, *, taps, pp, margin):
    mask = mask_ref[...]                              # (1, pp): 1 in image, 0 on pad ring

    def accum(get_tap, w_ref, acc):
        for t, s in enumerate(taps):
            tap = get_tap(margin + s)                 # (Cin, pp)
            part = jnp.dot(w_ref[t], tap, preferred_element_type=jnp.float32)
            acc = part if acc is None else acc + part
        return acc

    def store_hidden(h):
        # zero the pad ring so it acts as zero-padding for the next conv
        act_ref[:, margin:margin + pp] = (h * mask).astype(act_ref.dtype)

    # keep the (never-written) margins zero across all layers
    act_ref[...] = jnp.zeros_like(act_ref)

    # dr1: conv over concat([feat, inp], channel) expressed as two tap groups
    acc = accum(lambda lo: feat_ref[0, :, lo:lo + pp], w1a_ref, None)
    acc = accum(lambda lo: x_ref[0, :, lo:lo + pp], w1b_ref, acc)
    store_hidden(jnp.maximum(acc + b1_ref[...], 0.0))

    # dr2, dr3: intermediates stay resident in VMEM scratch
    acc = accum(lambda lo: act_ref[:, lo:lo + pp], w2_ref, None)
    store_hidden(jnp.maximum(acc + b2_ref[...], 0.0))

    acc = accum(lambda lo: act_ref[:, lo:lo + pp], w3_ref, None)
    store_hidden(jnp.maximum(acc + b3_ref[...], 0.0))

    # dr4: 3-channel output, no activation, lane-dense channels-first store
    acc = accum(lambda lo: act_ref[:, lo:lo + pp], w4_ref, None)
    o_ref[0] = (acc + b4_ref[...]).astype(o_ref.dtype)


def dr_head(feat, inp, params):
    """Fused DR head (dr1..dr4) at input resolution; returns (B, 3, H, W) f32."""
    B, C, H, W = feat.shape
    pp, margin, ptot, taps = _geom(H, W)

    (w1, b1), (w2, b2) = params["dr1"], params["dr2"]
    (w3, b3), (w4, b4) = params["dr3"], params["dr4"]
    CM = w1.shape[-1]

    w1a, w1b = _w_taps(w1[:, :, :C, :]), _w_taps(w1[:, :, C:, :])
    w2k, w3k, w4k = _w_taps(w2), _w_taps(w3), _w_taps(w4)
    b1k, b2k, b3k, b4k = _b_col(b1), _b_col(b2), _b_col(b3), _b_col(b4)

    mask = jnp.zeros((H + 2, W + 2), jnp.bfloat16).at[1:-1, 1:-1].set(1.0)
    mask = mask.reshape(1, pp)

    featw = _to_wide(feat, margin)
    xw = _to_wide(inp, margin)

    in_specs = [
        pl.BlockSpec((1, C, ptot), lambda i: (i, 0, 0)),
        pl.BlockSpec((1, 3, ptot), lambda i: (i, 0, 0)),
        _full_spec((1, pp)),
        _full_spec(w1a.shape), _full_spec(w1b.shape), _full_spec((CM, 1)),
        _full_spec(w2k.shape), _full_spec((CM, 1)),
        _full_spec(w3k.shape), _full_spec((CM, 1)),
        _full_spec(w4k.shape), _full_spec((3, 1)),
    ]

    flops = int(2 * B * 9 * pp * (C * CM + 3 * CM + 2 * CM * CM + CM * 3))
    bytes_accessed = int(featw.size * 2 + xw.size * 2 + B * 3 * pp * 4 + 8192)
    cost = pl.CostEstimate(flops=flops, transcendentals=0,
                           bytes_accessed=bytes_accessed)

    out = pl.pallas_call(
        functools.partial(_dr_head_kernel, taps=taps, pp=pp, margin=margin),
        out_shape=jax.ShapeDtypeStruct((B, 3, pp), jnp.float32),
        grid=(B,),
        in_specs=in_specs,
        out_specs=pl.BlockSpec((1, 3, pp), lambda i: (i, 0, 0)),
        scratch_shapes=[pltpu.VMEM((CM, ptot), jnp.bfloat16)],
        compiler_params=pltpu.CompilerParams(dimension_semantics=("parallel",)),
        cost_estimate=cost,
    )(featw, xw, mask, w1a, w1b, b1k, w2k, b2k, w3k, b3k, w4k, b4k)
    return _from_flat(out, H, W)


# ----------------------------------------------------------------------------
# XLA glue: resampling, params, model
# ----------------------------------------------------------------------------
def nearest_resize(x, oh, ow):
    """F.interpolate(mode='nearest') for NCHW (index gather; used only twice)."""
    H, W = x.shape[2], x.shape[3]
    ri = (jnp.arange(oh) * H) // oh
    ci = (jnp.arange(ow) * W) // ow
    return x[:, :, ri[:, None], ci[None, :]]


def upsample2(x):
    """Exact 2x nearest upsample as broadcast-style repeats (no gather)."""
    return jnp.repeat(jnp.repeat(x, 2, axis=2), 2, axis=3)


def downsample2(x):
    """Keep even rows/cols: equals the stride-2 conv's output sample points."""
    return x[:, :, ::2, ::2]


def init_params(key, C=16):
    specs = {
        "e1": (3, C), "e2": (C, C), "e3": (C, C), "e4": (C, C),
        "e5": (C, C), "e6": (C, C),
        "d5": (C, C), "d4": (C, C), "d3": (C, C), "d2": (C, C), "d1": (C, C),
        "dr1": (C + 3, C), "dr2": (C, C), "dr3": (C, C), "dr4": (C, 3),
    }
    params = {}
    for idx, name in enumerate(sorted(specs)):
        cin, cout = specs[name]
        kw, kb = jax.random.split(jax.random.fold_in(key, idx))
        w = jax.random.normal(kw, (3, 3, cin, cout), jnp.float32) * (2.0 / (9 * cin)) ** 0.5
        b = jax.random.normal(kb, (1, cout), jnp.float32) * 0.01
        params[name] = (w, b)
    return params


def gladnet_forward(params, inp):
    """GLADNet forward.  Input / output are NCHW float32 (PyTorch convention)."""
    B, _, H, W = inp.shape
    x = inp.astype(jnp.float32)

    # --- global illumination estimation (IDE) at fixed 96x96 ---
    x96 = nearest_resize(x, 96, 96)
    e1 = conv3x3(x96, *params["e1"])                          # 96
    e2 = downsample2(conv3x3(e1, *params["e2"]))              # 48
    e3 = downsample2(conv3x3(e2, *params["e3"]))              # 24
    e4 = downsample2(conv3x3(e3, *params["e4"]))              # 12
    e5 = downsample2(conv3x3(e4, *params["e5"]))              # 6
    e6 = downsample2(conv3x3(e5, *params["e6"]))              # 3

    d = e6
    for name, skip in (("d5", e5), ("d4", e4), ("d3", e3), ("d2", e2), ("d1", e1)):
        d = upsample2(d)
        d = conv3x3(d, *params[name], residual=skip)          # skip-add fused in-kernel

    # --- back to input resolution, fused detail-reconstruction head ---
    feat = nearest_resize(d, H, W)
    return dr_head(feat, x, params)                           # (B, 3, H, W) float32


# ----------------------------------------------------------------------------
# Reference conv (silent sanity check of the Pallas kernel)
# ----------------------------------------------------------------------------
def _reference_conv(x, w, b, relu, stride=1):
    y = lax.conv_general_dilated(
        x, w, window_strides=(stride, stride), padding=((1, 1), (1, 1)),
        dimension_numbers=("NCHW", "HWIO", "NCHW"),
        preferred_element_type=jnp.float32,
    )
    y = y + b.reshape(1, -1, 1, 1)
    return jnp.maximum(y, 0.0) if relu else y


if __name__ == "__main__":
    key = jax.random.PRNGKey(0)
    C = 16
    params = init_params(key, C)

    # sanity: Pallas conv (bf16 inputs, f32 accumulation) vs lax.conv on the
    # same bf16-cast inputs, stride 1 and (subsampled) stride 2.
    kc = jax.random.fold_in(key, 1234)
    xt = jax.random.normal(kc, (2, 5, 12, 10), jnp.float32)
    wt = jax.random.normal(jax.random.fold_in(kc, 1), (3, 3, 5, 7), jnp.float32) * 0.2
    bt = jax.random.normal(jax.random.fold_in(kc, 2), (1, 7), jnp.float32) * 0.1
    xb, wb = xt.astype(jnp.bfloat16), wt.astype(jnp.bfloat16)

    got1 = conv3x3(xt, wt, bt, relu=True, out_dtype=jnp.float32)
    want1 = _reference_conv(xb, wb, bt, relu=True, stride=1)
    assert float(jnp.max(jnp.abs(got1 - want1))) < 5e-3

    got2 = got1[:, :, ::2, ::2]
    want2 = _reference_conv(xb, wb, bt, relu=True, stride=2)
    assert float(jnp.max(jnp.abs(got2 - want2))) < 5e-3

    # GLADNet forward at small input shape (batch=2, 3 channels, 16x16)
    inp = jax.random.normal(jax.random.fold_in(key, 999), (2, 3, 16, 16), jnp.float32)
    fwd = jax.jit(functools.partial(gladnet_forward, params))
    out = jax.block_until_ready(fwd(inp))
    assert out.shape == (2, 3, 16, 16)
    assert out.dtype == jnp.float32
    print("KERNEL_OK")
</pallas_src>

<mosaic_0001>
module attributes {stable_mosaic.version = 11 : i64} {
  func.func @_conv3x3_kernel(%arg0: i32, %arg1: memref<1x5x194xbf16, #tpu.memory_space<vmem>>, %arg2: memref<9x7x5xbf16, #tpu.memory_space<vmem>>, %arg3: memref<7x1xf32, #tpu.memory_space<vmem>>, %arg4: memref<1x7x168xf32, #tpu.memory_space<vmem>>) attributes {dimension_semantics = [#tpu.dimension_semantics<parallel>], iteration_bounds = array<i64: 2>, scalar_prefetch = 0 : i64, scratch_operands = 0 : i64, tpu.core_type = #tpu.core_type<tc>, window_params = [{transform_indices = @transform_0, window_bounds = array<i64: 1, 5, 194>}, {pipeline_mode = #tpu.pipeline_mode<synchronous>, transform_indices = @transform_1, window_bounds = array<i64: 9, 7, 5>}, {pipeline_mode = #tpu.pipeline_mode<synchronous>, transform_indices = @transform_2, window_bounds = array<i64: 7, 1>}, {transform_indices = @transform_3, window_bounds = array<i64: 1, 7, 168>}]} {
    %c0 = arith.constant 0 : index
    %c0_0 = arith.constant 0 : index
    %c0_1 = arith.constant 0 : index
    %0 = vector.load %arg1[%c0, %c0_0, %c0_1] : memref<1x5x194xbf16, #tpu.memory_space<vmem>>, vector<1x5x168xbf16>
    %1 = vector.shape_cast %0 : vector<1x5x168xbf16> to vector<5x168xbf16>
    %c0_2 = arith.constant 0 : index
    %c0_3 = arith.constant 0 : index
    %c0_4 = arith.constant 0 : index
    %2 = vector.load %arg2[%c0_2, %c0_3, %c0_4] : memref<9x7x5xbf16, #tpu.memory_space<vmem>>, vector<1x7x5xbf16>
    %3 = vector.shape_cast %2 : vector<1x7x5xbf16> to vector<7x5xbf16>
    %cst = arith.constant dense<0.000000e+00> : vector<7x168xf32>
    %4 = tpu.matmul %3, %1, %cst {dimension_numbers = #tpu.dot_dimension_numbers<[1], [0], [0], [1], [0, 0, 1, 1], [], []>} : vector<7x5xbf16>, vector<5x168xbf16>, vector<7x168xf32> -> vector<7x168xf32>
    %c0_5 = arith.constant 0 : index
    %c0_6 = arith.constant 0 : index
    %c1 = arith.constant 1 : index
    %5 = vector.load %arg1[%c0_5, %c0_6, %c1] : memref<1x5x194xbf16, #tpu.memory_space<vmem>>, vector<1x5x168xbf16>
    %6 = vector.shape_cast %5 : vector<1x5x168xbf16> to vector<5x168xbf16>
    %c1_7 = arith.constant 1 : index
    %c0_8 = arith.constant 0 : index
    %c0_9 = arith.constant 0 : index
    %7 = vector.load %arg2[%c1_7, %c0_8, %c0_9] : memref<9x7x5xbf16, #tpu.memory_space<vmem>>, vector<1x7x5xbf16>
    %8 = vector.shape_cast %7 : vector<1x7x5xbf16> to vector<7x5xbf16>
    %cst_10 = arith.constant dense<0.000000e+00> : vector<7x168xf32>
    %9 = tpu.matmul %8, %6, %cst_10 {dimension_numbers = #tpu.dot_dimension_numbers<[1], [0], [0], [1], [0, 0, 1, 1], [], []>} : vector<7x5xbf16>, vector<5x168xbf16>, vector<7x168xf32> -> vector<7x168xf32>
    %10 = arith.addf %4, %9 : vector<7x168xf32>
    %c0_11 = arith.constant 0 : index
    %c0_12 = arith.constant 0 : index
    %c2 = arith.constant 2 : index
    %11 = vector.load %arg1[%c0_11, %c0_12, %c2] : memref<1x5x194xbf16, #tpu.memory_space<vmem>>, vector<1x5x168xbf16>
    %12 = vector.shape_cast %11 : vector<1x5x168xbf16> to vector<5x168xbf16>
    %c2_13 = arith.constant 2 : index
    %c0_14 = arith.constant 0 : index
    %c0_15 = arith.constant 0 : index
    %13 = vector.load %arg2[%c2_13, %c0_14, %c0_15] : memref<9x7x5xbf16, #tpu.memory_space<vmem>>, vector<1x7x5xbf16>
    %14 = vector.shape_cast %13 : vector<1x7x5xbf16> to vector<7x5xbf16>
    %cst_16 = arith.constant dense<0.000000e+00> : vector<7x168xf32>
    %15 = tpu.matmul %14, %12, %cst_16 {dimension_numbers = #tpu.dot_dimension_numbers<[1], [0], [0], [1], [0, 0, 1, 1], [], []>} : vector<7x5xbf16>, vector<5x168xbf16>, vector<7x168xf32> -> vector<7x168xf32>
    %16 = arith.addf %10, %15 : vector<7x168xf32>
    %c0_17 = arith.constant 0 : index
    %c0_18 = arith.constant 0 : index
    %c12 = arith.constant 12 : index
    %17 = vector.load %arg1[%c0_17, %c0_18, %c12] : memref<1x5x194xbf16, #tpu.memory_space<vmem>>, vector<1x5x168xbf16>
    %18 = vector.shape_cast %17 : vector<1x5x168xbf16> to vector<5x168xbf16>
    %c3 = arith.constant 3 : index
    %c0_19 = arith.constant 0 : index
    %c0_20 = arith.constant 0 : index
    %19 = vector.load %arg2[%c3, %c0_19, %c0_20] : memref<9x7x5xbf16, #tpu.memory_space<vmem>>, vector<1x7x5xbf16>
    %20 = vector.shape_cast %19 : vector<1x7x5xbf16> to vector<7x5xbf16>
    %cst_21 = arith.constant dense<0.000000e+00> : vector<7x168xf32>
    %21 = tpu.matmul %20, %18, %cst_21 {dimension_numbers = #tpu.dot_dimension_numbers<[1], [0], [0], [1], [0, 0, 1, 1], [], []>} : vector<7x5xbf16>, vector<5x168xbf16>, vector<7x168xf32> -> vector<7x168xf32>
    %22 = arith.addf %16, %21 : vector<7x168xf32>
    %c0_22 = arith.constant 0 : index
    %c0_23 = arith.constant 0 : index
    %c13 = arith.constant 13 : index
    %23 = vector.load %arg1[%c0_22, %c0_23, %c13] : memref<1x5x194xbf16, #tpu.memory_space<vmem>>, vector<1x5x168xbf16>
    %24 = vector.shape_cast %23 : vector<1x5x168xbf16> to vector<5x168xbf16>
    %c4 = arith.constant 4 : index
    %c0_24 = arith.constant 0 : index
    %c0_25 = arith.constant 0 : index
    %25 = vector.load %arg2[%c4, %c0_24, %c0_25] : memref<9x7x5xbf16, #tpu.memory_space<vmem>>, vector<1x7x5xbf16>
    %26 = vector.shape_cast %25 : vector<1x7x5xbf16> to vector<7x5xbf16>
    %cst_26 = arith.constant dense<0.000000e+00> : vector<7x168xf32>
    %27 = tpu.matmul %26, %24, %cst_26 {dimension_numbers = #tpu.dot_dimension_numbers<[1], [0], [0], [1], [0, 0, 1, 1], [], []>} : vector<7x5xbf16>, vector<5x168xbf16>, vector<7x168xf32> -> vector<7x168xf32>
    %28 = arith.addf %22, %27 : vector<7x168xf32>
    %c0_27 = arith.constant 0 : index
    %c0_28 = arith.constant 0 : index
    %c14 = arith.constant 14 : index
    %29 = vector.load %arg1[%c0_27, %c0_28, %c14] : memref<1x5x194xbf16, #tpu.memory_space<vmem>>, vector<1x5x168xbf16>
    %30 = vector.shape_cast %29 : vector<1x5x168xbf16> to vector<5x168xbf16>
    %c5 = arith.constant 5 : index
    %c0_29 = arith.constant 0 : index
    %c0_30 = arith.constant 0 : index
    %31 = vector.load %arg2[%c5, %c0_29, %c0_30] : memref<9x7x5xbf16, #tpu.memory_space<vmem>>, vector<1x7x5xbf16>
    %32 = vector.shape_cast %31 : vector<1x7x5xbf16> to vector<7x5xbf16>
    %cst_31 = arith.constant dense<0.000000e+00> : vector<7x168xf32>
    %33 = tpu.matmul %32, %30, %cst_31 {dimension_numbers = #tpu.dot_dimension_numbers<[1], [0], [0], [1], [0, 0, 1, 1], [], []>} : vector<7x5xbf16>, vector<5x168xbf16>, vector<7x168xf32> -> vector<7x168xf32>
    %34 = arith.addf %28, %33 : vector<7x168xf32>
    %c0_32 = arith.constant 0 : index
    %c0_33 = arith.constant 0 : index
    %c24 = arith.constant 24 : index
    %35 = vector.load %arg1[%c0_32, %c0_33, %c24] : memref<1x5x194xbf16, #tpu.memory_space<vmem>>, vector<1x5x168xbf16>
    %36 = vector.shape_cast %35 : vector<1x5x168xbf16> to vector<5x168xbf16>
    %c6 = arith.constant 6 : index
    %c0_34 = arith.constant 0 : index
    %c0_35 = arith.constant 0 : index
    %37 = vector.load %arg2[%c6, %c0_34, %c0_35] : memref<9x7x5xbf16, #tpu.memory_space<vmem>>, vector<1x7x5xbf16>
    %38 = vector.shape_cast %37 : vector<1x7x5xbf16> to vector<7x5xbf16>
    %cst_36 = arith.constant dense<0.000000e+00> : vector<7x168xf32>
    %39 = tpu.matmul %38, %36, %cst_36 {dimension_numbers = #tpu.dot_dimension_numbers<[1], [0], [0], [1], [0, 0, 1, 1], [], []>} : vector<7x5xbf16>, vector<5x168xbf16>, vector<7x168xf32> -> vector<7x168xf32>
    %40 = arith.addf %34, %39 : vector<7x168xf32>
    %c0_37 = arith.constant 0 : index
    %c0_38 = arith.constant 0 : index
    %c25 = arith.constant 25 : index
    %41 = vector.load %arg1[%c0_37, %c0_38, %c25] : memref<1x5x194xbf16, #tpu.memory_space<vmem>>, vector<1x5x168xbf16>
    %42 = vector.shape_cast %41 : vector<1x5x168xbf16> to vector<5x168xbf16>
    %c7 = arith.constant 7 : index
    %c0_39 = arith.constant 0 : index
    %c0_40 = arith.constant 0 : index
    %43 = vector.load %arg2[%c7, %c0_39, %c0_40] : memref<9x7x5xbf16, #tpu.memory_space<vmem>>, vector<1x7x5xbf16>
    %44 = vector.shape_cast %43 : vector<1x7x5xbf16> to vector<7x5xbf16>
    %cst_41 = arith.constant dense<0.000000e+00> : vector<7x168xf32>
    %45 = tpu.matmul %44, %42, %cst_41 {dimension_numbers = #tpu.dot_dimension_numbers<[1], [0], [0], [1], [0, 0, 1, 1], [], []>} : vector<7x5xbf16>, vector<5x168xbf16>, vector<7x168xf32> -> vector<7x168xf32>
    %46 = arith.addf %40, %45 : vector<7x168xf32>
    %c0_42 = arith.constant 0 : index
    %c0_43 = arith.constant 0 : index
    %c26 = arith.constant 26 : index
    %47 = vector.load %arg1[%c0_42, %c0_43, %c26] : memref<1x5x194xbf16, #tpu.memory_space<vmem>>, vector<1x5x168xbf16>
    %48 = vector.shape_cast %47 : vector<1x5x168xbf16> to vector<5x168xbf16>
    %c8 = arith.constant 8 : index
    %c0_44 = arith.constant 0 : index
    %c0_45 = arith.constant 0 : index
    %49 = vector.load %arg2[%c8, %c0_44, %c0_45] : memref<9x7x5xbf16, #tpu.memory_space<vmem>>, vector<1x7x5xbf16>
    %50 = vector.shape_cast %49 : vector<1x7x5xbf16> to vector<7x5xbf16>
    %cst_46 = arith.constant dense<0.000000e+00> : vector<7x168xf32>
    %51 = tpu.matmul %50, %48, %cst_46 {dimension_numbers = #tpu.dot_dimension_numbers<[1], [0], [0], [1], [0, 0, 1, 1], [], []>} : vector<7x5xbf16>, vector<5x168xbf16>, vector<7x168xf32> -> vector<7x168xf32>
    %52 = arith.addf %46, %51 : vector<7x168xf32>
    %c0_47 = arith.constant 0 : index
    %c0_48 = arith.constant 0 : index
    %53 = vector.load %arg3[%c0_47, %c0_48] : memref<7x1xf32, #tpu.memory_space<vmem>>, vector<7x1xf32>
    %54 = vector.broadcast %53 : vector<7x1xf32> to vector<7x168xf32>
    %55 = arith.addf %52, %54 : vector<7x168xf32>
    %cst_49 = arith.constant 0.000000e+00 : f32
    %56 = vector.broadcast %cst_49 : f32 to vector<7x168xf32>
    %57 = arith.maximumf %55, %56 : vector<7x168xf32>
    %c0_50 = arith.constant 0 : index
    %c0_51 = arith.constant 0 : index
    %c0_52 = arith.constant 0 : index
    %58 = vector.load %arg4[%c0_50, %c0_51, %c0_52] : memref<1x7x168xf32, #tpu.memory_space<vmem>>, vector<1x7x168xf32>
    %59 = vector.shape_cast %58 : vector<1x7x168xf32> to vector<7x168xf32>
    %60 = vector.shape_cast %57 : vector<7x168xf32> to vector<1x7x168xf32>
    tpu.vector_store %arg4[%c0_50, %c0_51, %c0_52], %60 {strides = array<i32>} : memref<1x7x168xf32, #tpu.memory_space<vmem>>, vector<1x7x168xf32>,
    return
  }
  func.func @transform_0(%arg0: i32) -> (i32, i32, i32) {
    %c0_i32 = arith.constant 0 : i32
    %c0_i32_0 = arith.constant 0 : i32
    %c0_i32_1 = arith.constant 0 : i32
    return %arg0, %c0_i32, %c0_i32_0 : i32, i32, i32
  }
  func.func @transform_1(%arg0: i32) -> (i32, i32, i32) {
    %c0_i32 = arith.constant 0 : i32
    %c0_i32_0 = arith.constant 0 : i32
    %c0_i32_1 = arith.constant 0 : i32
    %c0_i32_2 = arith.constant 0 : i32
    return %c0_i32, %c0_i32_0, %c0_i32_1 : i32, i32, i32
  }
  func.func @transform_2(%arg0: i32) -> (i32, i32) {
    %c0_i32 = arith.constant 0 : i32
    %c0_i32_0 = arith.constant 0 : i32
    %c0_i32_1 = arith.constant 0 : i32
    return %c0_i32, %c0_i32_0 : i32, i32
  }
  func.func @transform_3(%arg0: i32) -> (i32, i32, i32) {
    %c0_i32 = arith.constant 0 : i32
    %c0_i32_0 = arith.constant 0 : i32
    %c0_i32_1 = arith.constant 0 : i32
    return %arg0, %c0_i32, %c0_i32_0 : i32, i32, i32
  }
}

</mosaic_0001>

<llo_original>
// kernel: tpu_custom_call.1
$region0: #{tpu_custom_call.1}
  #allocation0 [shape = 'u32[]', space=smem, size = 0x4, offset = 0x4, fixed_abs, tag = 'smem constant byte address 0x4 - core index']
  #allocation1 [shape = 'u32[144,128]{1,0:T(1,128)}', space=vmem, size = 0x12000, scoped, tag = 'internal scratch']
  %s0 = inlined_call_operand.vmem [shape: bf16[2,5,194], index: 0, kind: input, shape index: {}]
  %s1 = inlined_call_operand.vmem [shape: bf16[9,7,5], index: 1, kind: input, shape index: {}]
  %s2 = inlined_call_operand.vmem [shape: f32[7,1], index: 2, kind: input, shape index: {}]
  %s3 = inlined_call_operand.vmem [shape: f32[2,7,168], index: 3, kind: output, shape index: {}]
  %s4 = sld [smem:[#allocation0]]
  $region45: #{tpu_custom_call.1} parent=0
    _
  %s6 = ssub.s32 1, %s4
  %s7 = scalar_select 0, %s6, %s4
  loop: start=0, step=1, limit=4
  $region2: #{tpu_custom_call.1} parent=0 // loop_pre_header
    _
  $region3: #{tpu_custom_call.1} parent=0 // loop_header
    %s9 = sphi 0, %s13
    %p10 = scmp.ge.s32.totalorder %s9, 4
    %s19 = sphi 0, %s21
    %s22 = sphi 0, %s19
    %s23 = sphi 0, %s22
    %s39 = sphi 0, %s23
    %s43 = sphi 0, %s43
    %s45 = sphi 0, %s43
    %s46 = sphi 0, %s45
    %s60 = sphi 0, %s46
    %s64 = sphi 0, %s64
    %s66 = sphi 0, %s64
    %s67 = sphi 0, %s66
    %s81 = sphi 0, %s67
    %s87 = sphi 0, %s89
    %s90 = sphi 0, %s87
    %s91 = sphi 0, %s90
    %s107 = sphi 0, %s91
  $region4: #{tpu_custom_call.1} parent=0 // loop_header_branch
    %12 = sbr.rel (%p10) target = $region8
  $region5: #{tpu_custom_call.1} parent=0 // loop_body
    %s14 = ssub.s32 %s9, 1
    %s15 = ssub.s32 %s9, 2
    %s16 = sadd.s32 %s9, 1
    %s17 = ssub.s32 %s9, %s16
    %p18 = scmp.eq.s32.totalorder %s17, 0
    %s20 = sadd.s32 %s19, 1
    %s21 = scalar_select %p18, %s19, %s20
    %p24 = pneg %p18
    %p25 = scmp.eq.s32.totalorder %s9, 1
    %p26 = por %p24, %p25
    %p27 = scmp.ne.s32.totalorder %s19, %s22
    %p28 = scmp.eq.s32.totalorder %s9, 0
    %p29 = por %p27, %p28
    %p30 = scmp.ne.s32.totalorder %s19, %s22
    %p31 = scmp.eq.s32.totalorder %s14, 1
    %p32 = por %p30, %p31
    %p33 = scmp.ne.s32.totalorder %s22, %s23
    %p34 = scmp.eq.s32.totalorder %s14, 0
    %p35 = por %p33, %p34
    %p36 = scmp.ne.s32.totalorder %s22, %s23
    %p37 = scmp.eq.s32.totalorder %s15, 1
    %p38 = por %p36, %p37
    %p40 = scmp.ne.s32.totalorder %s23, %s39
    %p41 = scmp.eq.s32.totalorder %s15, 0
    %p42 = por %p40, %p41
    %s44 = sadd.s32 %s43, 1
    %p47 = scmp.eq.s32.totalorder %s9, 1
    %p48 = scmp.ne.s32.totalorder %s43, %s45
    %p49 = scmp.eq.s32.totalorder %s9, 0
    %p50 = por %p48, %p49
    %p51 = scmp.ne.s32.totalorder %s43, %s45
    %p52 = scmp.eq.s32.totalorder %s14, 1
    %p53 = por %p51, %p52
    %p54 = scmp.ne.s32.totalorder %s45, %s46
    %p55 = scmp.eq.s32.totalorder %s14, 0
    %p56 = por %p54, %p55
    %p57 = scmp.ne.s32.totalorder %s45, %s46
    %p58 = scmp.eq.s32.totalorder %s15, 1
    %p59 = por %p57, %p58
    %p61 = scmp.ne.s32.totalorder %s46, %s60
    %p62 = scmp.eq.s32.totalorder %s15, 0
    %p63 = por %p61, %p62
    %s65 = sadd.s32 %s64, 1
    %p68 = scmp.eq.s32.totalorder %s9, 1
    %p69 = scmp.ne.s32.totalorder %s64, %s66
    %p70 = scmp.eq.s32.totalorder %s9, 0
    %p71 = por %p69, %p70
    %p72 = scmp.ne.s32.totalorder %s64, %s66
    %p73 = scmp.eq.s32.totalorder %s14, 1
    %p74 = por %p72, %p73
    %p75 = scmp.ne.s32.totalorder %s66, %s67
    %p76 = scmp.eq.s32.totalorder %s14, 0
    %p77 = por %p75, %p76
    %p78 = scmp.ne.s32.totalorder %s66, %s67
    %p79 = scmp.eq.s32.totalorder %s15, 1
    %p80 = por %p78, %p79
    %p82 = scmp.ne.s32.totalorder %s67, %s81
    %p83 = scmp.eq.s32.totalorder %s15, 0
    %p84 = por %p82, %p83
    %s85 = ssub.s32 %s9, %s16
    %p86 = scmp.eq.s32.totalorder %s85, 0
    %s88 = sadd.s32 %s87, 1
    %s89 = scalar_select %p86, %s87, %s88
    %p92 = pneg %p86
    %p93 = scmp.eq.s32.totalorder %s9, 1
    %p94 = por %p92, %p93
    %p95 = scmp.ne.s32.totalorder %s87, %s90
    %p96 = scmp.eq.s32.totalorder %s9, 0
    %p97 = por %p95, %p96
    %p98 = scmp.ne.s32.totalorder %s87, %s90
    %p99 = scmp.eq.s32.totalorder %s14, 1
    %p100 = por %p98, %p99
    %p101 = scmp.ne.s32.totalorder %s90, %s91
    %p102 = scmp.eq.s32.totalorder %s14, 0
    %p103 = por %p101, %p102
    %p104 = scmp.ne.s32.totalorder %s90, %s91
    %p105 = scmp.eq.s32.totalorder %s15, 1
    %p106 = por %p104, %p105
    %p108 = scmp.ne.s32.totalorder %s91, %s107
    %p109 = scmp.eq.s32.totalorder %s15, 0
    %p110 = por %p108, %p109
    %p111 = scmp.le.s32.totalorder 1, %s9
    %p112 = scmp.lt.s32.totalorder %s9, 3
    %p113 = pnand %p111, %p112
    %p114 = pneg %p113
    // Predicated region
    $region9: #{tpu_custom_call.1} parent=5 // pred_check
      _
    $region10: #{tpu_custom_call.1} parent=5 // pred_check_branch
      %116 = sbr.rel (%p113) target = $region12
    $region11: #{tpu_custom_call.1} parent=5 // pred_region
      %s117 = ssub.s32 %s9, 1
      // Predicated region
      $region13: #{tpu_custom_call.1} parent=11 // pred_check
        %p118 = pneg %p56
      $region14: #{tpu_custom_call.1} parent=11 // pred_check_branch
        %120 = sbr.rel (%p118) target = $region16
      $region15: #{tpu_custom_call.1} parent=11 // pred_region
        _
      $region16: #{tpu_custom_call.1} parent=11 // pred_fallthru
        _
      // Predicated region
      $region17: #{tpu_custom_call.1} parent=11 // pred_check
        %p121 = pneg %p77
      $region18: #{tpu_custom_call.1} parent=11 // pred_check_branch
        %123 = sbr.rel (%p121) target = $region20
      $region19: #{tpu_custom_call.1} parent=11 // pred_region
        _
      $region20: #{tpu_custom_call.1} parent=11 // pred_fallthru
        _
    $region12: #{tpu_custom_call.1} parent=5 // pred_fallthru
      _
    %p124 = scmp.lt.s32.totalorder %s9, 2
    // Predicated region
    $region21: #{tpu_custom_call.1} parent=5 // pred_check
      %p125 = pneg %p124
    $region22: #{tpu_custom_call.1} parent=5 // pred_check_branch
      %127 = sbr.rel (%p125) target = $region24
    $region23: #{tpu_custom_call.1} parent=5 // pred_region
      // Predicated region
      $region25: #{tpu_custom_call.1} parent=23 // pred_check
        %p128 = pneg %p29
      $region26: #{tpu_custom_call.1} parent=23 // pred_check_branch
        %130 = sbr.rel (%p128) target = $region28
      $region27: #{tpu_custom_call.1} parent=23 // pred_region
        %p131 = scmp.lt.s32.totalorder %s9, 1
        %s132 = scalar_select %p131, %s9, 1
        %s133 = smul.addr %s132, 2
        %s134 = smul.addr %s133, 4
        %s135 = scalar_lea.vmem %s0, %s134
      $region28: #{tpu_custom_call.1} parent=23 // pred_fallthru
        _
    $region24: #{tpu_custom_call.1} parent=5 // pred_fallthru
      _
    %p136 = scmp.le.s32.totalorder 1, %s9
    %p137 = scmp.lt.s32.totalorder %s9, 3
    %p138 = pnand %p136, %p137
    %p139 = pneg %p138
    // Predicated region
    $region29: #{tpu_custom_call.1} parent=5 // pred_check
      _
    $region30: #{tpu_custom_call.1} parent=5 // pred_check_branch
      %141 = sbr.rel (%p138) target = $region32
    $region31: #{tpu_custom_call.1} parent=5 // pred_region
      %s142 = ssub.s32 %s9, 1
      %p143 = scmp.lt.s32.totalorder %s14, 1
      %s144 = scalar_select %p143, %s14, 1
      %s145 = smul.addr %s144, 2
      %s146 = smul.addr %s145, 4
      %s147 = scalar_lea.vmem %s0, %s146
      %p148 = pneg %p35
      %p149 = pneg %p32
      %p150 = pneg %p56
      %p151 = pneg %p53
      %p152 = pneg %p77
      %p153 = pneg %p74
      %p154 = pneg %p103
      %p155 = pneg %p100
      %p156 = scmp.lt.s32.totalorder %s14, 1
      %s157 = scalar_select %p156, %s14, 1
      %s158 = smul.addr %s157, 2
      %s159 = smul.addr %s158, 8
      %s160 = scalar_lea.vmem %s3, %s159
      %p161 = scmp.lt.s32.totalorder %s14, 1
      %s162 = scalar_select %p161, %s14, 1
      %s163 = smul.addr %s162, 2
      %s164 = smul.addr %s163, 4
      %s165 = scalar_lea.vmem %s0, %s164
      %p166 = scmp.lt.s32.totalorder %s14, 1
      %s167 = scalar_select %p166, %s14, 1
      %s168 = smul.addr %s167, 2
      %s169 = smul.addr %s168, 8
      %s170 = scalar_lea.vmem %s3, %s169
      %v172 = vld [vmem:[%s165] sm:$0x77]
      %v173 = vld [vmem:[%s1] sm:$0xf]
      %s174 = scalar_lea.vmem %s1, 4
      %v175 = vld [vmem:[%s174] sm:$0xf]
      %v177 = vunpack.c.l.b16 %v172
      %v178 = vunpack.c.h.b16 %v172
      %v179 = vpack.c.b16 %v177, %v177
      %v180 = vpack.c.b16 %v178, %v178
      %181 = vrot.lane.b32.xlu0 %v179, 127
      %v182 = vpop.permute.xlu0 %181
      %183 = vrot.lane.b32.xlu0 %v180, 127
      %v184 = vpop.permute.xlu0 %183
      %vm185 = vcmask 1039360
      %v186 = vsel %vm185, %v182, %v184
      %vm187 = vcmask 39936
      %v189 = vsel %vm187, %v175, 0
      %vm191 = vcmask 1041408
      %vm192 = vcmask 1042432
      %v193 = vsel %vm191, 4294967295, 65535
      %v194 = vsel %vm192, %v193, 0
      %v196 = vand.u32 %v186, %v194
      %v199 = vand.u32 %v184, %v194
      %201 = vmatprep.subr.bf16.mxu0 0
      %202 = vmatpush1.bf16.msra.mxu0 0
      %203 = vmatprep.subr.bf16.mxu0 0
      %204 = vmatpush1.bf16.msra.mxu0 0
      %205 = vmatprep.subr.bf16.mxu0 0
      %206 = vmatpush1.bf16.msra.mxu0 0
      %207 = vmatprep.subr.bf16.mxu0 0
      %208 = vmatpush1.bf16.msra.mxu0 0
      %209 = vmatprep.subr.bf16.mxu0 0
      %210 = vmatpush1.bf16.msra.mxu0 0
      %211 = vmatprep.subr.bf16.mxu0 0
      %212 = vmatpush1.bf16.msra.mxu0 0
      %213 = vmatprep.subr.bf16.mxu0 0
      %214 = vmatpush1.bf16.msra.mxu0 0
      %215 = vmatprep.subr.bf16.mxu0 %v199
      %216 = vmatpush1.bf16.msra.mxu0 %v196
      %217 = vmatprep.subr.bf16.mxu0 0
      %218 = vmatpush2.bf16.msra.mxu0 0
      %219 = vmatprep.subr.bf16.mxu0 0
      %220 = vmatpush2.bf16.msra.mxu0 0
      %221 = vmatprep.subr.bf16.mxu0 0
      %222 = vmatpush2.bf16.msra.mxu0 0
      %223 = vmatprep.subr.bf16.mxu0 0
      %224 = vmatpush2.bf16.msra.mxu0 0
      %225 = vmatprep.subr.bf16.mxu0 0
      %226 = vmatpush2.bf16.msra.mxu0 0
      %227 = vmatprep.subr.bf16.mxu0 0
      %228 = vmatpush2.bf16.msra.mxu0 0
      %229 = vmatprep.subr.bf16.mxu0 0
      %230 = vmatpush2.bf16.msra.mxu0 0
      %231 = vmatprep.subr.bf16.mxu0 0
      %232 = vmatpush2.bf16.msra.mxu0 0
      %233 = vmatprep.mubr.bf16.mxu0 0
      %234 = vmatmul.mubr.bf16.gmra.mxu0 %v189
      %v235 = vpop.f32.mrf.mxu0
      %v236 = vadd.f32 0.0, %v235
      %v237 = vpop.f32.mrf.mxu0
      %v238 = vadd.f32 0.0, %v237
      %v239 = vpop.f32.mrf.mxu0
      %v240 = vpop.f32.mrf.mxu0
      %241 = vdwg.mxu0
      %v243 = vsel %vm187, %v173, 0
      %v246 = vand.u32 %v179, %v194
      %v249 = vand.u32 %v180, %v194
      %251 = vmatprep.subr.bf16.mxu0 0
      %252 = vmatpush1.bf16.msra.mxu0 0
      %253 = vmatprep.subr.bf16.mxu0 0
      %254 = vmatpush1.bf16.msra.mxu0 0
      %255 = vmatprep.subr.bf16.mxu0 0
      %256 = vmatpush1.bf16.msra.mxu0 0
      %257 = vmatprep.subr.bf16.mxu0 0
      %258 = vmatpush1.bf16.msra.mxu0 0
      %259 = vmatprep.subr.bf16.mxu0 0
      %260 = vmatpush1.bf16.msra.mxu0 0
      %261 = vmatprep.subr.bf16.mxu0 0
      %262 = vmatpush1.bf16.msra.mxu0 0
      %263 = vmatprep.subr.bf16.mxu0 0
      %264 = vmatpush1.bf16.msra.mxu0 0
      %265 = vmatprep.subr.bf16.mxu0 %v249
      %266 = vmatpush1.bf16.msra.mxu0 %v246
      %267 = vmatprep.subr.bf16.mxu0 0
      %268 = vmatpush2.bf16.msra.mxu0 0
      %269 = vmatprep.subr.bf16.mxu0 0
      %270 = vmatpush2.bf16.msra.mxu0 0
      %271 = vmatprep.subr.bf16.mxu0 0
      %272 = vmatpush2.bf16.msra.mxu0 0
      %273 = vmatprep.subr.bf16.mxu0 0
      %274 = vmatpush2.bf16.msra.mxu0 0
      %275 = vmatprep.subr.bf16.mxu0 0
      %276 = vmatpush2.bf16.msra.mxu0 0
      %277 = vmatprep.subr.bf16.mxu0 0
      %278 = vmatpush2.bf16.msra.mxu0 0
      %279 = vmatprep.subr.bf16.mxu0 0
      %280 = vmatpush2.bf16.msra.mxu0 0
      %281 = vmatprep.subr.bf16.mxu0 0
      %282 = vmatpush2.bf16.msra.mxu0 0
      %283 = vmatprep.mubr.bf16.mxu0 0
      %284 = vmatmul.mubr.bf16.gmra.mxu0 %v243
      %v285 = vpop.f32.mrf.mxu0
      %v286 = vadd.f32 %v236, %v285
      %v287 = vpop.f32.mrf.mxu0
      %v288 = vadd.f32 %v238, %v287
      %v289 = vpop.f32.mrf.mxu0
      %v290 = vpop.f32.mrf.mxu0
      %291 = vdwg.mxu0
      %s292 = scalar_lea.vmem %s1, 8
      %v293 = vld [vmem:[%s292] sm:$0xf]
      %294 = vrot.lane.b32.xlu0 %v179, 126
      %v295 = vpop.permute.xlu0 %294
      %296 = vrot.lane.b32.xlu0 %v180, 126
      %v297 = vpop.permute.xlu0 %296
      %vm298 = vcmask 1031168
      %v299 = vsel %vm298, %v295, %v297
      %v301 = vsel %vm187, %v293, 0
      %v304 = vand.u32 %v299, %v194
      %v307 = vand.u32 %v297, %v194
      %309 = vmatprep.subr.bf16.mxu0 0
      %310 = vmatpush1.bf16.msra.mxu0 0
      %311 = vmatprep.subr.bf16.mxu0 0
      %312 = vmatpush1.bf16.msra.mxu0 0
      %313 = vmatprep.subr.bf16.mxu0 0
      %314 = vmatpush1.bf16.msra.mxu0 0
      %315 = vmatprep.subr.bf16.mxu0 0
      %316 = vmatpush1.bf16.msra.mxu0 0
      %317 = vmatprep.subr.bf16.mxu0 0
      %318 = vmatpush1.bf16.msra.mxu0 0
      %319 = vmatprep.subr.bf16.mxu0 0
      %320 = vmatpush1.bf16.msra.mxu0 0
      %321 = vmatprep.subr.bf16.mxu0 0
      %322 = vmatpush1.bf16.msra.mxu0 0
      %323 = vmatprep.subr.bf16.mxu0 %v307
      %324 = vmatpush1.bf16.msra.mxu0 %v304
      %325 = vmatprep.subr.bf16.mxu0 0
      %326 = vmatpush2.bf16.msra.mxu0 0
      %327 = vmatprep.subr.bf16.mxu0 0
      %328 = vmatpush2.bf16.msra.mxu0 0
      %329 = vmatprep.subr.bf16.mxu0 0
      %330 = vmatpush2.bf16.msra.mxu0 0
      %331 = vmatprep.subr.bf16.mxu0 0
      %332 = vmatpush2.bf16.msra.mxu0 0
      %333 = vmatprep.subr.bf16.mxu0 0
      %334 = vmatpush2.bf16.msra.mxu0 0
      %335 = vmatprep.subr.bf16.mxu0 0
      %336 = vmatpush2.bf16.msra.mxu0 0
      %337 = vmatprep.subr.bf16.mxu0 0
      %338 = vmatpush2.bf16.msra.mxu0 0
      %339 = vmatprep.subr.bf16.mxu0 0
      %340 = vmatpush2.bf16.msra.mxu0 0
      %341 = vmatprep.mubr.bf16.mxu0 0
      %342 = vmatmul.mubr.bf16.gmra.mxu0 %v301
      %v343 = vpop.f32.mrf.mxu0
      %v344 = vadd.f32 0.0, %v343
      %v345 = vpop.f32.mrf.mxu0
      %v346 = vadd.f32 0.0, %v345
      %v347 = vpop.f32.mrf.mxu0
      %v348 = vpop.f32.mrf.mxu0
      %349 = vdwg.mxu0
      %v350 = vadd.f32 %v286, %v344
      %v351 = vadd.f32 %v288, %v346
      %s352 = scalar_lea.vmem %s1, 12
      %v353 = vld [vmem:[%s352] sm:$0xf]
      %354 = vrot.lane.b32.xlu0 %v179, 116
      %v355 = vpop.permute.xlu0 %354
      %356 = vrot.lane.b32.xlu0 %v180, 116
      %v357 = vpop.permute.xlu0 %356
      %vm358 = vcmask 949248
      %v359 = vsel %vm358, %v355, %v357
      %v361 = vsel %vm187, %v353, 0
      %v364 = vand.u32 %v359, %v194
      %v367 = vand.u32 %v357, %v194
      %369 = vmatprep.subr.bf16.mxu0 0
      %370 = vmatpush1.bf16.msra.mxu0 0
      %371 = vmatprep.subr.bf16.mxu0 0
      %372 = vmatpush1.bf16.msra.mxu0 0
      %373 = vmatprep.subr.bf16.mxu0 0
      %374 = vmatpush1.bf16.msra.mxu0 0
      %375 = vmatprep.subr.bf16.mxu0 0
      %376 = vmatpush1.bf16.msra.mxu0 0
      %377 = vmatprep.subr.bf16.mxu0 0
      %378 = vmatpush1.bf16.msra.mxu0 0
      %379 = vmatprep.subr.bf16.mxu0 0
      %380 = vmatpush1.bf16.msra.mxu0 0
      %381 = vmatprep.subr.bf16.mxu0 0
      %382 = vmatpush1.bf16.msra.mxu0 0
      %383 = vmatprep.subr.bf16.mxu0 %v367
      %384 = vmatpush1.bf16.msra.mxu0 %v364
      %385 = vmatprep.subr.bf16.mxu0 0
      %386 = vmatpush2.bf16.msra.mxu0 0
      %387 = vmatprep.subr.bf16.mxu0 0
      %388 = vmatpush2.bf16.msra.mxu0 0
      %389 = vmatprep.subr.bf16.mxu0 0
      %390 = vmatpush2.bf16.msra.mxu0 0
      %391 = vmatprep.subr.bf16.mxu0 0
      %392 = vmatpush2.bf16.msra.mxu0 0
      %393 = vmatprep.subr.bf16.mxu0 0
      %394 = vmatpush2.bf16.msra.mxu0 0
      %395 = vmatprep.subr.bf16.mxu0 0
      %396 = vmatpush2.bf16.msra.mxu0 0
      %397 = vmatprep.subr.bf16.mxu0 0
      %398 = vmatpush2.bf16.msra.mxu0 0
      %399 = vmatprep.subr.bf16.mxu0 0
      %400 = vmatpush2.bf16.msra.mxu0 0
      %401 = vmatprep.mubr.bf16.mxu0 0
      %402 = vmatmul.mubr.bf16.gmra.mxu0 %v361
      %v403 = vpop.f32.mrf.mxu0
      %v404 = vadd.f32 0.0, %v403
      %v405 = vpop.f32.mrf.mxu0
      %v406 = vadd.f32 0.0, %v405
      %v407 = vpop.f32.mrf.mxu0
      %v408 = vpop.f32.mrf.mxu0
      %409 = vdwg.mxu0
      %v410 = vadd.f32 %v350, %v404
      %v411 = vadd.f32 %v351, %v406
      %s412 = scalar_lea.vmem %s1, 16
      %v413 = vld [vmem:[%s412] sm:$0xf]
      %414 = vrot.lane.b32.xlu0 %v179, 115
      %v415 = vpop.permute.xlu0 %414
      %416 = vrot.lane.b32.xlu0 %v180, 115
      %v417 = vpop.permute.xlu0 %416
      %vm418 = vcmask 941056
      %v419 = vsel %vm418, %v415, %v417
      %v421 = vsel %vm187, %v413, 0
      %v424 = vand.u32 %v419, %v194
      %v427 = vand.u32 %v417, %v194
      %429 = vmatprep.subr.bf16.mxu0 0
      %430 = vmatpush1.bf16.msra.mxu0 0
      %431 = vmatprep.subr.bf16.mxu0 0
      %432 = vmatpush1.bf16.msra.mxu0 0
      %433 = vmatprep.subr.bf16.mxu0 0
      %434 = vmatpush1.bf16.msra.mxu0 0
      %435 = vmatprep.subr.bf16.mxu0 0
      %436 = vmatpush1.bf16.msra.mxu0 0
      %437 = vmatprep.subr.bf16.mxu0 0
      %438 = vmatpush1.bf16.msra.mxu0 0
      %439 = vmatprep.subr.bf16.mxu0 0
      %440 = vmatpush1.bf16.msra.mxu0 0
      %441 = vmatprep.subr.bf16.mxu0 0
      %442 = vmatpush1.bf16.msra.mxu0 0
      %443 = vmatprep.subr.bf16.mxu0 %v427
      %444 = vmatpush1.bf16.msra.mxu0 %v424
      %445 = vmatprep.subr.bf16.mxu0 0
      %446 = vmatpush2.bf16.msra.mxu0 0
      %447 = vmatprep.subr.bf16.mxu0 0
      %448 = vmatpush2.bf16.msra.mxu0 0
      %449 = vmatprep.subr.bf16.mxu0 0
      %450 = vmatpush2.bf16.msra.mxu0 0
      %451 = vmatprep.subr.bf16.mxu0 0
      %452 = vmatpush2.bf16.msra.mxu0 0
      %453 = vmatprep.subr.bf16.mxu0 0
      %454 = vmatpush2.bf16.msra.mxu0 0
      %455 = vmatprep.subr.bf16.mxu0 0
      %456 = vmatpush2.bf16.msra.mxu0 0
      %457 = vmatprep.subr.bf16.mxu0 0
      %458 = vmatpush2.bf16.msra.mxu0 0
      %459 = vmatprep.subr.bf16.mxu0 0
      %460 = vmatpush2.bf16.msra.mxu0 0
      %461 = vmatprep.mubr.bf16.mxu0 0
      %462 = vmatmul.mubr.bf16.gmra.mxu0 %v421
      %v463 = vpop.f32.mrf.mxu0
      %v464 = vadd.f32 0.0, %v463
      %v465 = vpop.f32.mrf.mxu0
      %v466 = vadd.f32 0.0, %v465
      %v467 = vpop.f32.mrf.mxu0
      %v468 = vpop.f32.mrf.mxu0
      %469 = vdwg.mxu0
      %v470 = vadd.f32 %v410, %v464
      %v471 = vadd.f32 %v411, %v466
      %s472 = scalar_lea.vmem %s1, 20
      %v473 = vld [vmem:[%s472] sm:$0xf]
      %474 = vrot.lane.b32.xlu0 %v179, 114
      %v475 = vpop.permute.xlu0 %474
      %476 = vrot.lane.b32.xlu0 %v180, 114
      %v477 = vpop.permute.xlu0 %476
      %vm478 = vcmask 932864
      %v479 = vsel %vm478, %v475, %v477
      %v481 = vsel %vm187, %v473, 0
      %v484 = vand.u32 %v479, %v194
      %v487 = vand.u32 %v477, %v194
      %489 = vmatprep.subr.bf16.mxu0 0
      %490 = vmatpush1.bf16.msra.mxu0 0
      %491 = vmatprep.subr.bf16.mxu0 0
      %492 = vmatpush1.bf16.msra.mxu0 0
      %493 = vmatprep.subr.bf16.mxu0 0
      %494 = vmatpush1.bf16.msra.mxu0 0
      %495 = vmatprep.subr.bf16.mxu0 0
      %496 = vmatpush1.bf16.msra.mxu0 0
      %497 = vmatprep.subr.bf16.mxu0 0
      %498 = vmatpush1.bf16.msra.mxu0 0
      %499 = vmatprep.subr.bf16.mxu0 0
      %500 = vmatpush1.bf16.msra.mxu0 0
      %501 = vmatprep.subr.bf16.mxu0 0
      %502 = vmatpush1.bf16.msra.mxu0 0
      %503 = vmatprep.subr.bf16.mxu0 %v487
      %504 = vmatpush1.bf16.msra.mxu0 %v484
      %505 = vmatprep.subr.bf16.mxu0 0
      %506 = vmatpush2.bf16.msra.mxu0 0
      %507 = vmatprep.subr.bf16.mxu0 0
      %508 = vmatpush2.bf16.msra.mxu0 0
      %509 = vmatprep.subr.bf16.mxu0 0
      %510 = vmatpush2.bf16.msra.mxu0 0
      %511 = vmatprep.subr.bf16.mxu0 0
      %512 = vmatpush2.bf16.msra.mxu0 0
      %513 = vmatprep.subr.bf16.mxu0 0
      %514 = vmatpush2.bf16.msra.mxu0 0
      %515 = vmatprep.subr.bf16.mxu0 0
      %516 = vmatpush2.bf16.msra.mxu0 0
      %517 = vmatprep.subr.bf16.mxu0 0
      %518 = vmatpush2.bf16.msra.mxu0 0
      %519 = vmatprep.subr.bf16.mxu0 0
      %520 = vmatpush2.bf16.msra.mxu0 0
      %521 = vmatprep.mubr.bf16.mxu0 0
      %522 = vmatmul.mubr.bf16.gmra.mxu0 %v481
      %v523 = vpop.f32.mrf.mxu0
      %v524 = vadd.f32 0.0, %v523
      %v525 = vpop.f32.mrf.mxu0
      %v526 = vadd.f32 0.0, %v525
      %v527 = vpop.f32.mrf.mxu0
      %v528 = vpop.f32.mrf.mxu0
      %529 = vdwg.mxu0
      %v530 = vadd.f32 %v470, %v524
      %v531 = vadd.f32 %v471, %v526
      %s532 = scalar_lea.vmem %s1, 24
      %v533 = vld [vmem:[%s532] sm:$0xf]
      %534 = vrot.lane.b32.xlu0 %v179, 104
      %v535 = vpop.permute.xlu0 %534
      %536 = vrot.lane.b32.xlu0 %v180, 104
      %v537 = vpop.permute.xlu0 %536
      %vm538 = vcmask 850944
      %v539 = vsel %vm538, %v535, %v537
      %v541 = vsel %vm187, %v533, 0
      %v544 = vand.u32 %v539, %v194
      %v547 = vand.u32 %v537, %v194
      %549 = vmatprep.subr.bf16.mxu0 0
      %550 = vmatpush1.bf16.msra.mxu0 0
      %551 = vmatprep.subr.bf16.mxu0 0
      %552 = vmatpush1.bf16.msra.mxu0 0
      %553 = vmatprep.subr.bf16.mxu0 0
      %554 = vmatpush1.bf16.msra.mxu0 0
      %555 = vmatprep.subr.bf16.mxu0 0
      %556 = vmatpush1.bf16.msra.mxu0 0
      %557 = vmatprep.subr.bf16.mxu0 0
      %558 = vmatpush1.bf16.msra.mxu0 0
      %559 = vmatprep.subr.bf16.mxu0 0
      %560 = vmatpush1.bf16.msra.mxu0 0
      %561 = vmatprep.subr.bf16.mxu0 0
      %562 = vmatpush1.bf16.msra.mxu0 0
      %563 = vmatprep.subr.bf16.mxu0 %v547
      %564 = vmatpush1.bf16.msra.mxu0 %v544
      %565 = vmatprep.subr.bf16.mxu0 0
      %566 = vmatpush2.bf16.msra.mxu0 0
      %567 = vmatprep.subr.bf16.mxu0 0
      %568 = vmatpush2.bf16.msra.mxu0 0
      %569 = vmatprep.subr.bf16.mxu0 0
      %570 = vmatpush2.bf16.msra.mxu0 0
      %571 = vmatprep.subr.bf16.mxu0 0
      %572 = vmatpush2.bf16.msra.mxu0 0
      %573 = vmatprep.subr.bf16.mxu0 0
      %574 = vmatpush2.bf16.msra.mxu0 0
      %575 = vmatprep.subr.bf16.mxu0 0
      %576 = vmatpush2.bf16.msra.mxu0 0
      %577 = vmatprep.subr.bf16.mxu0 0
      %578 = vmatpush2.bf16.msra.mxu0 0
      %579 = vmatprep.subr.bf16.mxu0 0
      %580 = vmatpush2.bf16.msra.mxu0 0
      %581 = vmatprep.mubr.bf16.mxu0 0
      %582 = vmatmul.mubr.bf16.gmra.mxu0 %v541
      %v583 = vpop.f32.mrf.mxu0
      %v584 = vadd.f32 0.0, %v583
      %v585 = vpop.f32.mrf.mxu0
      %v586 = vadd.f32 0.0, %v585
      %v587 = vpop.f32.mrf.mxu0
      %v588 = vpop.f32.mrf.mxu0
      %589 = vdwg.mxu0
      %v590 = vadd.f32 %v530, %v584
      %v591 = vadd.f32 %v531, %v586
      %s592 = scalar_lea.vmem %s1, 28
      %v593 = vld [vmem:[%s592] sm:$0xf]
      %594 = vrot.lane.b32.xlu0 %v179, 103
      %v595 = vpop.permute.xlu0 %594
      %596 = vrot.lane.b32.xlu0 %v180, 103
      %v597 = vpop.permute.xlu0 %596
      %vm598 = vcmask 842752
      %v599 = vsel %vm598, %v595, %v597
      %v601 = vsel %vm187, %v593, 0
      %v604 = vand.u32 %v599, %v194
      %v607 = vand.u32 %v597, %v194
      %609 = vmatprep.subr.bf16.mxu0 0
      %610 = vmatpush1.bf16.msra.mxu0 0
      %611 = vmatprep.subr.bf16.mxu0 0
      %612 = vmatpush1.bf16.msra.mxu0 0
      %613 = vmatprep.subr.bf16.mxu0 0
      %614 = vmatpush1.bf16.msra.mxu0 0
      %615 = vmatprep.subr.bf16.mxu0 0
      %616 = vmatpush1.bf16.msra.mxu0 0
      %617 = vmatprep.subr.bf16.mxu0 0
      %618 = vmatpush1.bf16.msra.mxu0 0
      %619 = vmatprep.subr.bf16.mxu0 0
      %620 = vmatpush1.bf16.msra.mxu0 0
      %621 = vmatprep.subr.bf16.mxu0 0
      %622 = vmatpush1.bf16.msra.mxu0 0
      %623 = vmatprep.subr.bf16.mxu0 %v607
      %624 = vmatpush1.bf16.msra.mxu0 %v604
      %625 = vmatprep.subr.bf16.mxu0 0
      %626 = vmatpush2.bf16.msra.mxu0 0
      %627 = vmatprep.subr.bf16.mxu0 0
      %628 = vmatpush2.bf16.msra.mxu0 0
      %629 = vmatprep.subr.bf16.mxu0 0
      %630 = vmatpush2.bf16.msra.mxu0 0
      %631 = vmatprep.subr.bf16.mxu0 0
      %632 = vmatpush2.bf16.msra.mxu0 0
      %633 = vmatprep.subr.bf16.mxu0 0
      %634 = vmatpush2.bf16.msra.mxu0 0
      %635 = vmatprep.subr.bf16.mxu0 0
      %636 = vmatpush2.bf16.msra.mxu0 0
      %637 = vmatprep.subr.bf16.mxu0 0
      %638 = vmatpush2.bf16.msra.mxu0 0
      %639 = vmatprep.subr.bf16.mxu0 0
      %640 = vmatpush2.bf16.msra.mxu0 0
      %641 = vmatprep.mubr.bf16.mxu0 0
      %642 = vmatmul.mubr.bf16.gmra.mxu0 %v601
      %v643 = vpop.f32.mrf.mxu0
      %v644 = vadd.f32 0.0, %v643
      %v645 = vpop.f32.mrf.mxu0
      %v646 = vadd.f32 0.0, %v645
      %v647 = vpop.f32.mrf.mxu0
      %v648 = vpop.f32.mrf.mxu0
      %649 = vdwg.mxu0
      %v650 = vadd.f32 %v590, %v644
      %v651 = vadd.f32 %v591, %v646
      %s652 = scalar_lea.vmem %s1, 32
      %v653 = vld [vmem:[%s652] sm:$0xf]
      %654 = vrot.lane.b32.xlu0 %v179, 102
      %v655 = vpop.permute.xlu0 %654
      %656 = vrot.lane.b32.xlu0 %v180, 102
      %v657 = vpop.permute.xlu0 %656
      %vm658 = vcmask 834560
      %v659 = vsel %vm658, %v655, %v657
      %v661 = vsel %vm187, %v653, 0
      %v664 = vand.u32 %v659, %v194
      %v667 = vand.u32 %v657, %v194
      %669 = vmatprep.subr.bf16.mxu0 0
      %670 = vmatpush1.bf16.msra.mxu0 0
      %671 = vmatprep.subr.bf16.mxu0 0
      %672 = vmatpush1.bf16.msra.mxu0 0
      %673 = vmatprep.subr.bf16.mxu0 0
      %674 = vmatpush1.bf16.msra.mxu0 0
      %675 = vmatprep.subr.bf16.mxu0 0
      %676 = vmatpush1.bf16.msra.mxu0 0
      %677 = vmatprep.subr.bf16.mxu0 0
      %678 = vmatpush1.bf16.msra.mxu0 0
      %679 = vmatprep.subr.bf16.mxu0 0
      %680 = vmatpush1.bf16.msra.mxu0 0
      %681 = vmatprep.subr.bf16.mxu0 0
      %682 = vmatpush1.bf16.msra.mxu0 0
      %683 = vmatprep.subr.bf16.mxu0 %v667
      %684 = vmatpush1.bf16.msra.mxu0 %v664
      %685 = vmatprep.subr.bf16.mxu0 0
      %686 = vmatpush2.bf16.msra.mxu0 0
      %687 = vmatprep.subr.bf16.mxu0 0
      %688 = vmatpush2.bf16.msra.mxu0 0
      %689 = vmatprep.subr.bf16.mxu0 0
      %690 = vmatpush2.bf16.msra.mxu0 0
      %691 = vmatprep.subr.bf16.mxu0 0
      %692 = vmatpush2.bf16.msra.mxu0 0
      %693 = vmatprep.subr.bf16.mxu0 0
      %694 = vmatpush2.bf16.msra.mxu0 0
      %695 = vmatprep.subr.bf16.mxu0 0
      %696 = vmatpush2.bf16.msra.mxu0 0
      %697 = vmatprep.subr.bf16.mxu0 0
      %698 = vmatpush2.bf16.msra.mxu0 0
      %699 = vmatprep.subr.bf16.mxu0 0
      %700 = vmatpush2.bf16.msra.mxu0 0
      %701 = vmatprep.mubr.bf16.mxu0 0
      %702 = vmatmul.mubr.bf16.gmra.mxu0 %v661
      %v703 = vpop.f32.mrf.mxu0
      %v704 = vadd.f32 0.0, %v703
      %v705 = vpop.f32.mrf.mxu0
      %v706 = vadd.f32 0.0, %v705
      %v707 = vpop.f32.mrf.mxu0
      %v708 = vpop.f32.mrf.mxu0
      %709 = vdwg.mxu0
      %v710 = vadd.f32 %v650, %v704
      %v711 = vadd.f32 %v651, %v706
      %v712 = vld [vmem:[%s2] sm:$0x7f]
      %714 = vset.pattern.permute.xlu0 0
      %715 = vperm.xlu0 %714, %v712
      %v716 = vpop.permute.xlu0 %715
      %v718 = vadd.f32 %v710, %v716
      %v719 = vadd.f32 %v711, %v716
      %v720 = vmax.f32 %v718, 0.0
      %v721 = vmax.f32 %v719, 0.0
      %722 = vst [vmem:[%s170] sm:$0x7f] %v720
      %vm723 = vcmask 325632
      %724 = vst.msk [vmem:[%s170 + $0x8] sm:$0x7f] %vm723, %v721
      %p725 = scmp.lt.s32.totalorder %s14, 1
      %s726 = scalar_select %p725, %s14, 1
      %s727 = smul.addr %s726, 2
      %s728 = smul.addr %s727, 8
      %s729 = scalar_lea.vmem %s3, %s728
      // Predicated region
      $region33: #{tpu_custom_call.1} parent=31 // pred_check
        %p730 = pneg %p100
      $region34: #{tpu_custom_call.1} parent=31 // pred_check_branch
        %732 = sbr.rel (%p730) target = $region36
      $region35: #{tpu_custom_call.1} parent=31 // pred_region
        _
      $region36: #{tpu_custom_call.1} parent=31 // pred_fallthru
        _
    $region32: #{tpu_custom_call.1} parent=5 // pred_fallthru
      _
    %p733 = scmp.le.s32.totalorder 2, %s9
    // Predicated region
    $region37: #{tpu_custom_call.1} parent=5 // pred_check
      %p734 = pneg %p733
    $region38: #{tpu_custom_call.1} parent=5 // pred_check_branch
      %736 = sbr.rel (%p734) target = $region40
    $region39: #{tpu_custom_call.1} parent=5 // pred_region
      %s737 = ssub.s32 %s9, 2
      // Predicated region
      $region41: #{tpu_custom_call.1} parent=39 // pred_check
        %p738 = pneg %p106
      $region42: #{tpu_custom_call.1} parent=39 // pred_check_branch
        %740 = sbr.rel (%p738) target = $region44
      $region43: #{tpu_custom_call.1} parent=39 // pred_region
        %p741 = scmp.lt.s32.totalorder %s15, 1
        %s742 = scalar_select %p741, %s15, 1
        %s743 = smul.addr %s742, 2
        %s744 = smul.addr %s743, 8
        %s745 = scalar_lea.vmem %s3, %s744
      $region44: #{tpu_custom_call.1} parent=39 // pred_fallthru
        _
    $region40: #{tpu_custom_call.1} parent=5 // pred_fallthru
      _
  $region6: #{tpu_custom_call.1} parent=0 // loop_footer
    %s13 = sadd.s32 1, %s9
  $region7: #{tpu_custom_call.1} parent=0 // loop_footer_branch
    %8 = sbr.rel target = $region3
  $region8: #{tpu_custom_call.1} parent=0 // loop_exit
    _

</llo_original>
